<compile_context>
chip_gen: v7x
topology: tpu7x:2x2x1
jax: 0.10.0
libtpu: 0.0.40
codegen_flags: <defaults>
</compile_context>

<pallas_src>
import jax
import jax.numpy as jnp
from jax.experimental import pallas as pl
from jax.experimental.pallas import tpu as pltpu


# ----------------------------------------------------------------------------
# Pallas kernels
# ----------------------------------------------------------------------------

def encoder_gates_kernel(x_ref, wenc_ref, benc_ref, scale_ref, shift_ref,
                         wih0_ref, b0_ref, gx_ref):
    """gx = (((x @ W_enc + b_enc) * scale + shift) @ W_ih0 + b0).

    Linear encoder + folded BatchNorm1d (+ Dropout(0.25)=identity) with the
    LSTM layer-0 input projection hoisted out of the recurrence and fused
    here as one batched, lane-dense (4H-wide) matmul.
    """
    enc = jnp.dot(x_ref[...], wenc_ref[...],
                  preferred_element_type=jnp.float32) + benc_ref[...]
    enc = enc * scale_ref[...] + shift_ref[...]
    gx_ref[...] = jnp.dot(enc, wih0_ref[...],
                          preferred_element_type=jnp.float32) + b0_ref[...]


def bn_head_kernel(y_ref, scale_ref, shift_ref, w_ref, b_ref, o_ref):
    """out = ((y * scale + shift) @ W_fc + b_fc)  (folded BN + logits Linear)."""
    z = y_ref[...] * scale_ref[...] + shift_ref[...]
    o_ref[...] = jnp.dot(z, w_ref[...],
                         preferred_element_type=jnp.float32) + b_ref[...]


def lstm2_kernel(gx_ref, len_ref, whh0_ref, wcat1_ref, b1_ref,
                 y_ref, hn_ref, cn_ref):
    """Both LSTM layers fused, full time loop inside one kernel invocation.

    gx_ref : (T, B, 4H)  precomputed x @ W_ih0 + b0 for layer 0
    wcat1  : (2H, 4H)    concat([W_ih1, W_hh1]) so layer 2 is one matmul/step
    y_ref  : (T, B, H)   layer-2 outputs (zeroed past each sequence length)
    hn/cn  : (2, B, H)   final hidden / cell state per layer

    State (h1,c1,h2,c2) is carried through the fori_loop in vregs; the output
    block lives in VMEM for the whole call and is written back to HBM once.
    """
    T, B, G = gx_ref.shape
    H = G // 4

    lengths = len_ref[...]          # (B, 1) int32, loaded once
    whh0 = whh0_ref[...]            # (H, 4H)
    wcat1 = wcat1_ref[...]          # (2H, 4H)
    b1 = b1_ref[...]                # (1, 4H)

    def cell(gates, c):
        # PyTorch gate order: i, f, g, o
        i_g = jax.nn.sigmoid(gates[:, 0 * H:1 * H])
        f_g = jax.nn.sigmoid(gates[:, 1 * H:2 * H])
        g_g = jnp.tanh(gates[:, 2 * H:3 * H])
        o_g = jax.nn.sigmoid(gates[:, 3 * H:4 * H])
        c_new = f_g * c + i_g * g_g
        h_new = o_g * jnp.tanh(c_new)
        return h_new, c_new

    def body(t, carry):
        h1, c1, h2, c2 = carry
        valid = t < lengths                         # (B, 1) bool

        # ---- layer 1: x-projection already in gx_ref, only h @ W_hh here
        gates1 = gx_ref[t] + jnp.dot(h1, whh0,
                                     preferred_element_type=jnp.float32)
        h1n, c1n = cell(gates1, c1)
        h1u = jnp.where(valid, h1n, h1)
        c1u = jnp.where(valid, c1n, c1)

        # ---- layer 2: fused [x | h] @ W_cat, one MXU push per step
        #      (inter-layer dropout(0.2) is identity in eval mode)
        xh = jnp.concatenate([h1u, h2], axis=1)     # (B, 2H)
        gates2 = jnp.dot(xh, wcat1,
                         preferred_element_type=jnp.float32) + b1
        h2n, c2n = cell(gates2, c2)
        h2u = jnp.where(valid, h2n, h2)
        c2u = jnp.where(valid, c2n, c2)

        # VMEM-resident output block; zero-padded past sequence length
        y_ref[t] = jnp.where(valid, h2n, 0.0)
        return (h1u, c1u, h2u, c2u)

    z = jnp.zeros((B, H), jnp.float32)
    h1, c1, h2, c2 = jax.lax.fori_loop(0, T, body, (z, z, z, z), unroll=True)

    # Final states written once, after the loop.
    hn_ref[0] = h1
    hn_ref[1] = h2
    cn_ref[0] = c1
    cn_ref[1] = c2


# ----------------------------------------------------------------------------
# Wrappers (pallas_call plumbing)
# ----------------------------------------------------------------------------

def _row_tile(rows, max_rows=256):
    """Largest row tile <= max_rows that divides `rows` (multiple of 8 when
    tiling), so encoder/head matmuls stay VMEM-bounded and shard across TCs."""
    if rows <= max_rows:
        return rows
    t = (max_rows // 8) * 8
    while t >= 8:
        if rows % t == 0:
            return t
        t -= 8
    return rows


def encoder_gates(x2d, w_enc, b_enc, scale, shift, w_ih0, b0):
    M, I = x2d.shape
    H = w_enc.shape[1]
    G = w_ih0.shape[1]
    rt = _row_tile(M)
    return pl.pallas_call(
        encoder_gates_kernel,
        out_shape=jax.ShapeDtypeStruct((M, G), jnp.float32),
        grid=(M // rt,),
        in_specs=[pl.BlockSpec((rt, I), lambda i: (i, 0)),
                  pl.BlockSpec((I, H), lambda i: (0, 0)),
                  pl.BlockSpec((1, H), lambda i: (0, 0)),
                  pl.BlockSpec((1, H), lambda i: (0, 0)),
                  pl.BlockSpec((1, H), lambda i: (0, 0)),
                  pl.BlockSpec((H, G), lambda i: (0, 0)),
                  pl.BlockSpec((1, G), lambda i: (0, 0))],
        out_specs=pl.BlockSpec((rt, G), lambda i: (i, 0)),
        compiler_params=pltpu.CompilerParams(dimension_semantics=("parallel",)),
    )(x2d, w_enc, b_enc, scale, shift, w_ih0, b0)


def bn_head(y2d, scale, shift, w, b):
    M, H = y2d.shape
    C = w.shape[1]
    rt = _row_tile(M)
    return pl.pallas_call(
        bn_head_kernel,
        out_shape=jax.ShapeDtypeStruct((M, C), jnp.float32),
        grid=(M // rt,),
        in_specs=[pl.BlockSpec((rt, H), lambda i: (i, 0)),
                  pl.BlockSpec((1, H), lambda i: (0, 0)),
                  pl.BlockSpec((1, H), lambda i: (0, 0)),
                  pl.BlockSpec((H, C), lambda i: (0, 0)),
                  pl.BlockSpec((1, C), lambda i: (0, 0))],
        out_specs=pl.BlockSpec((rt, C), lambda i: (i, 0)),
        compiler_params=pltpu.CompilerParams(dimension_semantics=("parallel",)),
    )(y2d, scale, shift, w, b)


def lstm2_fused(gx, lengths2d, w_hh0, w_cat1, b1):
    T, B, G = gx.shape
    H = G // 4
    return pl.pallas_call(
        lstm2_kernel,
        out_shape=(jax.ShapeDtypeStruct((T, B, H), jnp.float32),
                   jax.ShapeDtypeStruct((2, B, H), jnp.float32),
                   jax.ShapeDtypeStruct((2, B, H), jnp.float32)),
        grid=(1,),
        in_specs=[pl.BlockSpec((T, B, G), lambda i: (0, 0, 0)),
                  pl.BlockSpec((B, 1), lambda i: (0, 0)),
                  pl.BlockSpec((H, G), lambda i: (0, 0)),
                  pl.BlockSpec((2 * H, G), lambda i: (0, 0)),
                  pl.BlockSpec((1, G), lambda i: (0, 0))],
        out_specs=(pl.BlockSpec((T, B, H), lambda i: (0, 0, 0)),
                   pl.BlockSpec((2, B, H), lambda i: (0, 0, 0)),
                   pl.BlockSpec((2, B, H), lambda i: (0, 0, 0))),
        compiler_params=pltpu.CompilerParams(dimension_semantics=("arbitrary",)),
    )(gx, lengths2d, w_hh0, w_cat1, b1)


def rnn_forward(params, x, lengths):
    """x: (T, B, input_size), lengths: (B,) int — returns (logits_flatten, (h_n, c_n))."""
    T, B, I = x.shape
    H = params["w_enc"].shape[1]
    C = params["w_fc"].shape[1]
    eps = 1e-5

    scale = params["bn_gamma"] / jnp.sqrt(params["bn_var"] + eps)
    shift = params["bn_beta"] - params["bn_mean"] * scale
    lengths2d = lengths.reshape(B, 1).astype(jnp.int32)

    # notes_encoder + shared BN (eval) [+ Dropout(0.25)==identity]
    # + hoisted LSTM layer-0 input projection (one batched matmul).
    gx = encoder_gates(x.reshape(T * B, I), params["w_enc"], params["b_enc"],
                       scale, shift, params["w_ih0"], params["b0"]
                       ).reshape(T, B, 4 * H)

    # Both LSTM layers fused into a single kernel invocation.
    w_cat1 = jnp.concatenate([params["w_ih1"], params["w_hh1"]], axis=0)
    y2, h_n, c_n = lstm2_fused(gx, lengths2d, params["w_hh0"], w_cat1,
                               params["b1"])

    # shared BN (eval) [+ Dropout(0.1)==identity] + logits_fc
    logits = bn_head(y2.reshape(T * B, H), scale, shift,
                     params["w_fc"], params["b_fc"]).reshape(T, B, C)

    logits = jnp.transpose(logits, (1, 0, 2))                 # (B, T, C)
    binary = jnp.stack([logits, 1.0 - logits], axis=3)        # (B, T, C, 2)
    logits_flatten = binary.reshape(-1, 2)
    return logits_flatten, (h_n, c_n)


# ----------------------------------------------------------------------------
# Pure-JAX reference (same eval semantics) for a correctness check
# ----------------------------------------------------------------------------

def rnn_forward_ref(params, x, lengths):
    T, B, I = x.shape
    H = params["w_enc"].shape[1]
    eps = 1e-5
    scale = params["bn_gamma"] / jnp.sqrt(params["bn_var"] + eps)
    shift = params["bn_beta"] - params["bn_mean"] * scale

    enc = ((x.reshape(T * B, I) @ params["w_enc"] + params["b_enc"]) * scale
           + shift).reshape(T, B, H)

    def run_layer(xseq, w_ih, w_hh, b):
        def step(carry, inp):
            h, c = carry
            xt, t = inp
            gates = xt @ w_ih + h @ w_hh + b
            i_g = jax.nn.sigmoid(gates[:, :H])
            f_g = jax.nn.sigmoid(gates[:, H:2 * H])
            g_g = jnp.tanh(gates[:, 2 * H:3 * H])
            o_g = jax.nn.sigmoid(gates[:, 3 * H:])
            c_new = f_g * c + i_g * g_g
            h_new = o_g * jnp.tanh(c_new)
            m = (t < lengths).astype(jnp.float32)[:, None]
            return (m * h_new + (1 - m) * h, m * c_new + (1 - m) * c), m * h_new
        init = (jnp.zeros((B, H), jnp.float32), jnp.zeros((B, H), jnp.float32))
        (hT, cT), ys = jax.lax.scan(step, init, (xseq, jnp.arange(T)))
        return ys, hT, cT

    y1, h1, c1 = run_layer(enc, params["w_ih0"], params["w_hh0"], params["b0"])
    y2, h2, c2 = run_layer(y1, params["w_ih1"], params["w_hh1"], params["b1"])

    z = y2.reshape(T * B, H) * scale + shift
    logits = (z @ params["w_fc"] + params["b_fc"]).reshape(T, B, -1)
    logits = jnp.transpose(logits, (1, 0, 2))
    binary = jnp.stack([logits, 1.0 - logits], axis=3)
    return binary.reshape(-1, 2), (jnp.stack([h1, h2], 0), jnp.stack([c1, c2], 0))


# ----------------------------------------------------------------------------
# Deterministic parameter init + driver
# ----------------------------------------------------------------------------

def init_params(key, input_size, hidden_size, num_classes):
    ks = jax.random.split(key, 16)
    f32 = jnp.float32
    p = {
        "w_enc": 0.1 * jax.random.normal(ks[0], (input_size, hidden_size), f32),
        "b_enc": 0.1 * jax.random.normal(ks[1], (1, hidden_size), f32),
        "bn_gamma": 1.0 + 0.1 * jax.random.normal(ks[2], (1, hidden_size), f32),
        "bn_beta": 0.1 * jax.random.normal(ks[3], (1, hidden_size), f32),
        "bn_mean": 0.1 * jax.random.normal(ks[4], (1, hidden_size), f32),
        "bn_var": 0.5 + jax.random.uniform(ks[5], (1, hidden_size), f32),
        "w_fc": 0.1 * jax.random.normal(ks[6], (hidden_size, num_classes), f32),
        "b_fc": 0.1 * jax.random.normal(ks[7], (1, num_classes), f32),
    }
    for layer in range(2):
        p[f"w_ih{layer}"] = 0.1 * jax.random.normal(ks[8 + 3 * layer],
                                                    (hidden_size, 4 * hidden_size), f32)
        p[f"w_hh{layer}"] = 0.1 * jax.random.normal(ks[9 + 3 * layer],
                                                    (hidden_size, 4 * hidden_size), f32)
        # combined b_ih + b_hh
        p[f"b{layer}"] = 0.1 * jax.random.normal(ks[10 + 3 * layer],
                                                 (1, 4 * hidden_size), f32)
    return p


if __name__ == "__main__":
    INPUT_SIZE, HIDDEN, NUM_CLASSES = 16, 32, 8
    T, B = 8, 2

    key = jax.random.PRNGKey(0)
    k_param, k_x = jax.random.split(key)
    params = init_params(k_param, INPUT_SIZE, HIDDEN, NUM_CLASSES)

    x = jax.random.normal(k_x, (T, B, INPUT_SIZE), jnp.float32)
    lengths = jnp.array([T, 5], dtype=jnp.int32)   # sorted descending (pack_padded)

    logits_flat, (h_n, c_n) = rnn_forward(params, x, lengths)
    jax.block_until_ready((logits_flat, h_n, c_n))

    # sanity vs pure-JAX reference
    ref_flat, (h_ref, c_ref) = rnn_forward_ref(params, x, lengths)
    assert logits_flat.shape == (B * T * NUM_CLASSES, 2)
    assert h_n.shape == (2, B, HIDDEN) and c_n.shape == (2, B, HIDDEN)
    assert jnp.allclose(logits_flat, ref_flat, rtol=2e-3, atol=2e-3)
    assert jnp.allclose(h_n, h_ref, rtol=2e-3, atol=2e-3)
    assert jnp.allclose(c_n, c_ref, rtol=2e-3, atol=2e-3)

    print("KERNEL_OK")
</pallas_src>

<mosaic_0001>
module attributes {stable_mosaic.version = 11 : i64} {
  func.func @encoder_gates_kernel(%arg0: i32, %arg1: memref<16x16xf32, #tpu.memory_space<vmem>>, %arg2: memref<16x32xf32, #tpu.memory_space<vmem>>, %arg3: memref<1x32xf32, #tpu.memory_space<vmem>>, %arg4: memref<1x32xf32, #tpu.memory_space<vmem>>, %arg5: memref<1x32xf32, #tpu.memory_space<vmem>>, %arg6: memref<32x128xf32, #tpu.memory_space<vmem>>, %arg7: memref<1x128xf32, #tpu.memory_space<vmem>>, %arg8: memref<16x128xf32, #tpu.memory_space<vmem>>) attributes {dimension_semantics = [#tpu.dimension_semantics<parallel>], iteration_bounds = array<i64: 1>, scalar_prefetch = 0 : i64, scratch_operands = 0 : i64, tpu.core_type = #tpu.core_type<tc>, window_params = [{transform_indices = @transform_0, window_bounds = array<i64: 16, 16>}, {pipeline_mode = #tpu.pipeline_mode<synchronous>, transform_indices = @transform_1, window_bounds = array<i64: 16, 32>}, {pipeline_mode = #tpu.pipeline_mode<synchronous>, transform_indices = @transform_2, window_bounds = array<i64: 1, 32>}, {pipeline_mode = #tpu.pipeline_mode<synchronous>, transform_indices = @transform_3, window_bounds = array<i64: 1, 32>}, {pipeline_mode = #tpu.pipeline_mode<synchronous>, transform_indices = @transform_4, window_bounds = array<i64: 1, 32>}, {pipeline_mode = #tpu.pipeline_mode<synchronous>, transform_indices = @transform_5, window_bounds = array<i64: 32, 128>}, {pipeline_mode = #tpu.pipeline_mode<synchronous>, transform_indices = @transform_6, window_bounds = array<i64: 1, 128>}, {transform_indices = @transform_7, window_bounds = array<i64: 16, 128>}]} {
    %c0 = arith.constant 0 : index
    %c0_0 = arith.constant 0 : index
    %0 = vector.load %arg1[%c0, %c0_0] : memref<16x16xf32, #tpu.memory_space<vmem>>, vector<16x16xf32>
    %c0_1 = arith.constant 0 : index
    %c0_2 = arith.constant 0 : index
    %1 = vector.load %arg2[%c0_1, %c0_2] : memref<16x32xf32, #tpu.memory_space<vmem>>, vector<16x32xf32>
    %cst = arith.constant dense<0.000000e+00> : vector<16x32xf32>
    %2 = tpu.matmul %0, %1, %cst {dimension_numbers = #tpu.dot_dimension_numbers<[1], [0], [0], [1], [0, 0, 1, 1], [], []>} : vector<16x16xf32>, vector<16x32xf32>, vector<16x32xf32> -> vector<16x32xf32>
    %c0_3 = arith.constant 0 : index
    %c0_4 = arith.constant 0 : index
    %3 = vector.load %arg3[%c0_3, %c0_4] : memref<1x32xf32, #tpu.memory_space<vmem>>, vector<1x32xf32>
    %4 = vector.broadcast %3 : vector<1x32xf32> to vector<16x32xf32>
    %5 = arith.addf %2, %4 : vector<16x32xf32>
    %c0_5 = arith.constant 0 : index
    %c0_6 = arith.constant 0 : index
    %6 = vector.load %arg4[%c0_5, %c0_6] : memref<1x32xf32, #tpu.memory_space<vmem>>, vector<1x32xf32>
    %7 = vector.broadcast %6 : vector<1x32xf32> to vector<16x32xf32>
    %8 = arith.mulf %5, %7 : vector<16x32xf32>
    %c0_7 = arith.constant 0 : index
    %c0_8 = arith.constant 0 : index
    %9 = vector.load %arg5[%c0_7, %c0_8] : memref<1x32xf32, #tpu.memory_space<vmem>>, vector<1x32xf32>
    %10 = vector.broadcast %9 : vector<1x32xf32> to vector<16x32xf32>
    %11 = arith.addf %8, %10 : vector<16x32xf32>
    %c0_9 = arith.constant 0 : index
    %c0_10 = arith.constant 0 : index
    %12 = vector.load %arg6[%c0_9, %c0_10] : memref<32x128xf32, #tpu.memory_space<vmem>>, vector<32x128xf32>
    %cst_11 = arith.constant dense<0.000000e+00> : vector<16x128xf32>
    %13 = tpu.matmul %11, %12, %cst_11 {dimension_numbers = #tpu.dot_dimension_numbers<[1], [0], [0], [1], [0, 0, 1, 1], [], []>} : vector<16x32xf32>, vector<32x128xf32>, vector<16x128xf32> -> vector<16x128xf32>
    %c0_12 = arith.constant 0 : index
    %c0_13 = arith.constant 0 : index
    %14 = vector.load %arg7[%c0_12, %c0_13] : memref<1x128xf32, #tpu.memory_space<vmem>>, vector<1x128xf32>
    %15 = vector.broadcast %14 : vector<1x128xf32> to vector<16x128xf32>
    %16 = arith.addf %13, %15 : vector<16x128xf32>
    %c0_14 = arith.constant 0 : index
    %c0_15 = arith.constant 0 : index
    %17 = vector.load %arg8[%c0_14, %c0_15] : memref<16x128xf32, #tpu.memory_space<vmem>>, vector<16x128xf32>
    tpu.vector_store %arg8[%c0_14, %c0_15], %16 {strides = array<i32>} : memref<16x128xf32, #tpu.memory_space<vmem>>, vector<16x128xf32>,
    return
  }
  func.func @transform_0(%arg0: i32) -> (i32, i32) {
    %c0_i32 = arith.constant 0 : i32
    %c0_i32_0 = arith.constant 0 : i32
    return %arg0, %c0_i32 : i32, i32
  }
  func.func @transform_1(%arg0: i32) -> (i32, i32) {
    %c0_i32 = arith.constant 0 : i32
    %c0_i32_0 = arith.constant 0 : i32
    %c0_i32_1 = arith.constant 0 : i32
    return %c0_i32, %c0_i32_0 : i32, i32
  }
  func.func @transform_2(%arg0: i32) -> (i32, i32) {
    %c0_i32 = arith.constant 0 : i32
    %c0_i32_0 = arith.constant 0 : i32
    %c0_i32_1 = arith.constant 0 : i32
    return %c0_i32, %c0_i32_0 : i32, i32
  }
  func.func @transform_3(%arg0: i32) -> (i32, i32) {
    %c0_i32 = arith.constant 0 : i32
    %c0_i32_0 = arith.constant 0 : i32
    %c0_i32_1 = arith.constant 0 : i32
    return %c0_i32, %c0_i32_0 : i32, i32
  }
  func.func @transform_4(%arg0: i32) -> (i32, i32) {
    %c0_i32 = arith.constant 0 : i32
    %c0_i32_0 = arith.constant 0 : i32
    %c0_i32_1 = arith.constant 0 : i32
    return %c0_i32, %c0_i32_0 : i32, i32
  }
  func.func @transform_5(%arg0: i32) -> (i32, i32) {
    %c0_i32 = arith.constant 0 : i32
    %c0_i32_0 = arith.constant 0 : i32
    %c0_i32_1 = arith.constant 0 : i32
    return %c0_i32, %c0_i32_0 : i32, i32
  }
  func.func @transform_6(%arg0: i32) -> (i32, i32) {
    %c0_i32 = arith.constant 0 : i32
    %c0_i32_0 = arith.constant 0 : i32
    %c0_i32_1 = arith.constant 0 : i32
    return %c0_i32, %c0_i32_0 : i32, i32
  }
  func.func @transform_7(%arg0: i32) -> (i32, i32) {
    %c0_i32 = arith.constant 0 : i32
    %c0_i32_0 = arith.constant 0 : i32
    return %arg0, %c0_i32 : i32, i32
  }
}

</mosaic_0001>

<llo_original>
// kernel: tpu_custom_call.1
$region0: #{tpu_custom_call.1}
  #allocation0 [shape = 'u32[]', space=smem, size = 0x4, offset = 0x4, fixed_abs, tag = 'smem constant byte address 0x4 - core index']
  #allocation1 [shape = 'u32[144,128]{1,0:T(1,128)}', space=vmem, size = 0x12000, scoped, tag = 'internal scratch']
  %s0 = inlined_call_operand.hbm [shape: f32[16,16], index: 0, kind: input, shape index: {}]
  %s1 = inlined_call_operand.hbm [shape: f32[16,32], index: 1, kind: input, shape index: {}]
  %s2 = inlined_call_operand.vmem [shape: f32[1,32], index: 2, kind: input, shape index: {}]
  %s3 = inlined_call_operand.vmem [shape: f32[1,32], index: 3, kind: input, shape index: {}]
  %s4 = inlined_call_operand.vmem [shape: f32[1,32], index: 4, kind: input, shape index: {}]
  %s5 = inlined_call_operand.hbm [shape: f32[32,128], index: 5, kind: input, shape index: {}]
  %s6 = inlined_call_operand.vmem [shape: f32[1,128], index: 6, kind: input, shape index: {}]
  %s7 = inlined_call_operand.hbm [shape: f32[16,128], index: 7, kind: output, shape index: {}]
  %s8 = sld [smem:[#allocation0]]
  $region50: #{tpu_custom_call.1} parent=0
    _
  %s10 = ssub.s32 1, %s8
  %s11 = scalar_select 0, %s10, %s8
  $region1: #{tpu_custom_call.1} parent=0
    #allocation2 [shape = 'u8[8192]{0}', space=vmem, size = 0x2000, scoped, tag = 'input window, operand 0, single buffered']
    #allocation3 [shape = 's32[1]{0}', space=sflag, size = 0x4, scoped, tag = 'scoped memory for tpu_custom_call.1']
    #allocation4 [shape = 's32[1]{0}', space=sflag, size = 0x4, scoped, tag = 'scoped memory for tpu_custom_call.1']
    #allocation5 [shape = 'u8[8192]{0}', space=vmem, size = 0x2000, scoped, tag = 'input window, operand 1, single buffered']
    #allocation6 [shape = 's32[1]{0}', space=sflag, size = 0x4, scoped, tag = 'scoped memory for tpu_custom_call.1']
    #allocation7 [shape = 'u8[16384]{0}', space=vmem, size = 0x4000, scoped, tag = 'input window, operand 5, single buffered']
    #allocation8 [shape = 'u8[8192]{0}', space=vmem, size = 0x2000, scoped, tag = 'output window, operand 0, single buffered']
    %12 = vsyncpa [#allocation3], 0
    %13 = vsyncpa [#allocation6], 0
    %14 = vsyncpa [#allocation4], 0
    // Predicated region
    $region2: #{tpu_custom_call.1} parent=1 // pred_check
      _
    $region3: #{tpu_custom_call.1} parent=1 // pred_check_branch
      %16 = sbr.rel (0) target = $region5
    $region4: #{tpu_custom_call.1} parent=1 // pred_region
      %s18 = ssub.s32 256, 256
      %19 = vsyncadd [#allocation3], %s18
      %s20 = sshll.u32 [#allocation2], 4
      %s21 = int_to_ptr.vmem [resolvable:$true] %s20
      %26 = dma.hbm_to_vmem [thread:$0]  %s0, 256, %s21, [#allocation3], 128, 128, 8
    $region5: #{tpu_custom_call.1} parent=1 // pred_fallthru
      _
    // Predicated region
    $region6: #{tpu_custom_call.1} parent=1 // pred_check
      _
    $region7: #{tpu_custom_call.1} parent=1 // pred_check_branch
      %28 = sbr.rel (0) target = $region9
    $region8: #{tpu_custom_call.1} parent=1 // pred_region
      %s30 = ssub.s32 256, 256
      %31 = vsyncadd [#allocation6], %s30
      %s32 = sshll.u32 [#allocation5], 4
      %s33 = int_to_ptr.vmem [resolvable:$true] %s32
      %38 = dma.hbm_to_vmem [thread:$0]  %s1, 256, %s33, [#allocation6], 128, 128, 8
    $region9: #{tpu_custom_call.1} parent=1 // pred_fallthru
      _
    // Predicated region
    $region10: #{tpu_custom_call.1} parent=1 // pred_check
      _
    $region11: #{tpu_custom_call.1} parent=1 // pred_check_branch
      %40 = sbr.rel (0) target = $region13
    $region12: #{tpu_custom_call.1} parent=1 // pred_region
      _
    $region13: #{tpu_custom_call.1} parent=1 // pred_fallthru
      _
    // Predicated region
    $region14: #{tpu_custom_call.1} parent=1 // pred_check
      _
    $region15: #{tpu_custom_call.1} parent=1 // pred_check_branch
      %42 = sbr.rel (0) target = $region17
    $region16: #{tpu_custom_call.1} parent=1 // pred_region
      _
    $region17: #{tpu_custom_call.1} parent=1 // pred_fallthru
      _
    // Predicated region
    $region18: #{tpu_custom_call.1} parent=1 // pred_check
      _
    $region19: #{tpu_custom_call.1} parent=1 // pred_check_branch
      %44 = sbr.rel (0) target = $region21
    $region20: #{tpu_custom_call.1} parent=1 // pred_region
      _
    $region21: #{tpu_custom_call.1} parent=1 // pred_fallthru
      _
    // Predicated region
    $region22: #{tpu_custom_call.1} parent=1 // pred_check
      _
    $region23: #{tpu_custom_call.1} parent=1 // pred_check_branch
      %46 = sbr.rel (0) target = $region25
    $region24: #{tpu_custom_call.1} parent=1 // pred_region
      %s48 = ssub.s32 512, 512
      %49 = vsyncadd [#allocation6], %s48
      %s50 = sshll.u32 [#allocation7], 4
      %s51 = int_to_ptr.vmem [resolvable:$true] %s50
      %56 = dma.hbm_to_vmem [thread:$0]  %s5, 512, %s51, [#allocation6], 128, 128, 8
    $region25: #{tpu_custom_call.1} parent=1 // pred_fallthru
      _
    // Predicated region
    $region26: #{tpu_custom_call.1} parent=1 // pred_check
      _
    $region27: #{tpu_custom_call.1} parent=1 // pred_check_branch
      %58 = sbr.rel (0) target = $region29
    $region28: #{tpu_custom_call.1} parent=1 // pred_region
      _
    $region29: #{tpu_custom_call.1} parent=1 // pred_fallthru
      _
    // Predicated region
    $region30: #{tpu_custom_call.1} parent=1 // pred_check
      _
    $region31: #{tpu_custom_call.1} parent=1 // pred_check_branch
      %60 = sbr.rel (0) target = $region33
    $region32: #{tpu_custom_call.1} parent=1 // pred_region
      %61 = dma.done [#allocation3], 256
    $region33: #{tpu_custom_call.1} parent=1 // pred_fallthru
      _
    // Predicated region
    $region34: #{tpu_custom_call.1} parent=1 // pred_check
      _
    $region35: #{tpu_custom_call.1} parent=1 // pred_check_branch
      %63 = sbr.rel (0) target = $region37
    $region36: #{tpu_custom_call.1} parent=1 // pred_region
      %64 = dma.done [#allocation6], 256
    $region37: #{tpu_custom_call.1} parent=1 // pred_fallthru
      _
    // Predicated region
    $region38: #{tpu_custom_call.1} parent=1 // pred_check
      _
    $region39: #{tpu_custom_call.1} parent=1 // pred_check_branch
      %66 = sbr.rel (0) target = $region41
    $region40: #{tpu_custom_call.1} parent=1 // pred_region
      %67 = dma.done [#allocation6], 512
    $region41: #{tpu_custom_call.1} parent=1 // pred_fallthru
      _
    %v68 = vld [vmem:[#allocation2] sm:$0xff]
    %v69 = vld [vmem:[#allocation2 + $0x8] sm:$0xff]
    %v70 = vld [vmem:[#allocation5] sm:$0xff]
    %v71 = vld [vmem:[#allocation5 + $0x8] sm:$0xff]
    %v72 = vld [vmem:[%s2] sm:$0x1]
    %v74 = vlaneseq
    %v75 = vshrl.u32 %v74, 7
    %v76 = vsub.s32 0, %v75
    %v77 = vrot.slane %v72, %v76
    %vm79 = vcmask 130048
    %v81 = vsel %vm79, %v68, 0
    %v84 = vsel %vm79, %v69, 0
    %86 = vmatprep.subr.mxu0 0.0
    %87 = vmatpush1.msra.mxu0 %v70
    %88 = vmatprep.subr.mxu0 0.0
    %89 = vmatpush1.msra.mxu0 %v71
    %90 = vmatprep.subr.mxu0 0.0
    %91 = vmatpush1.msra.mxu0 0.0
    %92 = vmatprep.subr.mxu0 0.0
    %93 = vmatpush1.msra.mxu0 0.0
    %94 = vmatprep.subr.mxu0 0.0
    %95 = vmatpush1.msra.mxu0 0.0
    %96 = vmatprep.subr.mxu0 0.0
    %97 = vmatpush1.msra.mxu0 0.0
    %98 = vmatprep.subr.mxu0 0.0
    %99 = vmatpush1.msra.mxu0 0.0
    %100 = vmatprep.subr.mxu0 0.0
    %101 = vmatpush1.msra.mxu0 0.0
    %102 = vmatprep.subr.mxu0 0.0
    %103 = vmatpush1.msra.mxu0 0.0
    %104 = vmatprep.subr.mxu0 0.0
    %105 = vmatpush1.msra.mxu0 0.0
    %106 = vmatprep.subr.mxu0 0.0
    %107 = vmatpush1.msra.mxu0 0.0
    %108 = vmatprep.subr.mxu0 0.0
    %109 = vmatpush1.msra.mxu0 0.0
    %110 = vmatprep.subr.mxu0 0.0
    %111 = vmatpush1.msra.mxu0 0.0
    %112 = vmatprep.subr.mxu0 0.0
    %113 = vmatpush1.msra.mxu0 0.0
    %114 = vmatprep.subr.mxu0 0.0
    %115 = vmatpush1.msra.mxu0 0.0
    %116 = vmatprep.subr.mxu0 0.0
    %117 = vmatpush1.msra.mxu0 0.0
    %118 = vmatprep.subr.mxu0 0.0
    %119 = vmatpush1.msra.mxu0 0.0
    %120 = vmatprep.subr.mxu0 0.0
    %121 = vmatpush1.msra.mxu0 0.0
    %122 = vmatprep.subr.mxu0 0.0
    %123 = vmatpush1.msra.mxu0 0.0
    %124 = vmatprep.subr.mxu0 0.0
    %125 = vmatpush1.msra.mxu0 0.0
    %126 = vmatprep.subr.mxu0 0.0
    %127 = vmatpush1.msra.mxu0 0.0
    %128 = vmatprep.subr.mxu0 0.0
    %129 = vmatpush1.msra.mxu0 0.0
    %130 = vmatprep.subr.mxu0 0.0
    %131 = vmatpush1.msra.mxu0 0.0
    %132 = vmatprep.subr.mxu0 0.0
    %133 = vmatpush1.msra.mxu0 0.0
    %134 = vmatprep.subr.mxu0 0.0
    %135 = vmatpush1.msra.mxu0 0.0
    %136 = vmatprep.subr.mxu0 0.0
    %137 = vmatpush1.msra.mxu0 0.0
    %138 = vmatprep.subr.mxu0 0.0
    %139 = vmatpush1.msra.mxu0 0.0
    %140 = vmatprep.subr.mxu0 0.0
    %141 = vmatpush1.msra.mxu0 0.0
    %142 = vmatprep.subr.mxu0 0.0
    %143 = vmatpush1.msra.mxu0 0.0
    %144 = vmatprep.subr.mxu0 0.0
    %145 = vmatpush1.msra.mxu0 0.0
    %146 = vmatprep.subr.mxu0 0.0
    %147 = vmatpush1.msra.mxu0 0.0
    %148 = vmatprep.subr.mxu0 0.0
    %149 = vmatpush1.msra.mxu0 0.0
    %150 = vmatprep.mubr.f32.mxu0 0.0
    %151 = vmatmul.mubr.f32.gmra.mrb[0].mxu0 %v81
    %v152 = vpop.f32.mrb[0].mxu0
    %v153 = vadd.f32 %v77, %v152
    %v154 = vpop.f32.mrb[0].mxu0
    %155 = vmatprep.mubr.f32.mxu0 0.0
    %156 = vmatmul.mubr.f32.gmra.mrb[0].mxu0 %v84
    %v157 = vpop.f32.mrb[0].mxu0
    %v158 = vadd.f32 %v77, %v157
    %v159 = vpop.f32.mrb[0].mxu0
    %160 = vdwg.mxu0
    %v161 = vld [vmem:[%s3] sm:$0x1]
    %v163 = vlaneseq
    %v164 = vshrl.u32 %v163, 7
    %v165 = vsub.s32 0, %v164
    %v166 = vrot.slane %v161, %v165
    %v168 = vmul.f32 %v153, %v166
    %v169 = vmul.f32 %v158, %v166
    %v170 = vld [vmem:[%s4] sm:$0x1]
    %v172 = vlaneseq
    %v173 = vshrl.u32 %v172, 7
    %v174 = vsub.s32 0, %v173
    %v175 = vrot.slane %v170, %v174
    %v177 = vadd.f32 %v168, %v175
    %v178 = vadd.f32 %v169, %v175
    %v179 = vld [vmem:[#allocation7] sm:$0xff]
    %v180 = vld [vmem:[#allocation7 + $0x8] sm:$0xff]
    %v181 = vld [vmem:[#allocation7 + $0x10] sm:$0xff]
    %v182 = vld [vmem:[#allocation7 + $0x18] sm:$0xff]
    %v183 = vld [vmem:[%s6] sm:$0x1]
    %v185 = vlaneseq
    %v186 = vshrl.u32 %v185, 7
    %v187 = vsub.s32 0, %v186
    %v188 = vrot.slane %v183, %v187
    %vm190 = vcmask 261120
    %v192 = vsel %vm190, %v177, 0
    %v195 = vsel %vm190, %v178, 0
    %197 = vmatprep.subr.mxu0 0.0
    %198 = vmatpush1.msra.mxu0 %v179
    %199 = vmatprep.subr.mxu0 0.0
    %200 = vmatpush1.msra.mxu0 %v180
    %201 = vmatprep.subr.mxu0 0.0
    %202 = vmatpush1.msra.mxu0 %v181
    %203 = vmatprep.subr.mxu0 0.0
    %204 = vmatpush1.msra.mxu0 %v182
    %205 = vmatprep.subr.mxu0 0.0
    %206 = vmatpush1.msra.mxu0 0.0
    %207 = vmatprep.subr.mxu0 0.0
    %208 = vmatpush1.msra.mxu0 0.0
    %209 = vmatprep.subr.mxu0 0.0
    %210 = vmatpush1.msra.mxu0 0.0
    %211 = vmatprep.subr.mxu0 0.0
    %212 = vmatpush1.msra.mxu0 0.0
    %213 = vmatprep.subr.mxu0 0.0
    %214 = vmatpush1.msra.mxu0 0.0
    %215 = vmatprep.subr.mxu0 0.0
    %216 = vmatpush1.msra.mxu0 0.0
    %217 = vmatprep.subr.mxu0 0.0
    %218 = vmatpush1.msra.mxu0 0.0
    %219 = vmatprep.subr.mxu0 0.0
    %220 = vmatpush1.msra.mxu0 0.0
    %221 = vmatprep.subr.mxu0 0.0
    %222 = vmatpush1.msra.mxu0 0.0
    %223 = vmatprep.subr.mxu0 0.0
    %224 = vmatpush1.msra.mxu0 0.0
    %225 = vmatprep.subr.mxu0 0.0
    %226 = vmatpush1.msra.mxu0 0.0
    %227 = vmatprep.subr.mxu0 0.0
    %228 = vmatpush1.msra.mxu0 0.0
    %229 = vmatprep.subr.mxu0 0.0
    %230 = vmatpush1.msra.mxu0 0.0
    %231 = vmatprep.subr.mxu0 0.0
    %232 = vmatpush1.msra.mxu0 0.0
    %233 = vmatprep.subr.mxu0 0.0
    %234 = vmatpush1.msra.mxu0 0.0
    %235 = vmatprep.subr.mxu0 0.0
    %236 = vmatpush1.msra.mxu0 0.0
    %237 = vmatprep.subr.mxu0 0.0
    %238 = vmatpush1.msra.mxu0 0.0
    %239 = vmatprep.subr.mxu0 0.0
    %240 = vmatpush1.msra.mxu0 0.0
    %241 = vmatprep.subr.mxu0 0.0
    %242 = vmatpush1.msra.mxu0 0.0
    %243 = vmatprep.subr.mxu0 0.0
    %244 = vmatpush1.msra.mxu0 0.0
    %245 = vmatprep.subr.mxu0 0.0
    %246 = vmatpush1.msra.mxu0 0.0
    %247 = vmatprep.subr.mxu0 0.0
    %248 = vmatpush1.msra.mxu0 0.0
    %249 = vmatprep.subr.mxu0 0.0
    %250 = vmatpush1.msra.mxu0 0.0
    %251 = vmatprep.subr.mxu0 0.0
    %252 = vmatpush1.msra.mxu0 0.0
    %253 = vmatprep.subr.mxu0 0.0
    %254 = vmatpush1.msra.mxu0 0.0
    %255 = vmatprep.subr.mxu0 0.0
    %256 = vmatpush1.msra.mxu0 0.0
    %257 = vmatprep.subr.mxu0 0.0
    %258 = vmatpush1.msra.mxu0 0.0
    %259 = vmatprep.subr.mxu0 0.0
    %260 = vmatpush1.msra.mxu0 0.0
    %261 = vmatprep.mubr.f32.mxu0 0.0
    %262 = vmatmul.mubr.f32.gmra.mrb[0].mxu0 %v192
    %v263 = vpop.f32.mrb[0].mxu0
    %v264 = vadd.f32 %v188, %v263
    %v265 = vpop.f32.mrb[0].mxu0
    %266 = vmatprep.mubr.f32.mxu0 0.0
    %267 = vmatmul.mubr.f32.gmra.mrb[0].mxu0 %v195
    %v268 = vpop.f32.mrb[0].mxu0
    %v269 = vadd.f32 %v188, %v268
    %v270 = vpop.f32.mrb[0].mxu0
    %271 = vdwg.mxu0
    %272 = vst [vmem:[#allocation8] sm:$0xff] %v264
    %273 = vst [vmem:[#allocation8 + $0x8] sm:$0xff] %v269
    // Predicated region
    $region42: #{tpu_custom_call.1} parent=1 // pred_check
      _
    $region43: #{tpu_custom_call.1} parent=1 // pred_check_branch
      %275 = sbr.rel (0) target = $region45
    $region44: #{tpu_custom_call.1} parent=1 // pred_region
      %s277 = ssub.s32 256, 256
      %278 = vsyncadd [#allocation4], %s277
      %s279 = sshll.u32 [#allocation8], 4
      %s280 = int_to_ptr.vmem [resolvable:$true] %s279
      %285 = dma.vmem_to_hbm [thread:$0]  %s280, 256, %s7, [#allocation4], 128, 128, 8
    $region45: #{tpu_custom_call.1} parent=1 // pred_fallthru
      _
    // Predicated region
    $region46: #{tpu_custom_call.1} parent=1 // pred_check
      _
    $region47: #{tpu_custom_call.1} parent=1 // pred_check_branch
      %287 = sbr.rel (0) target = $region49
    $region48: #{tpu_custom_call.1} parent=1 // pred_region
      %288 = dma.done [#allocation4], 256
    $region49: #{tpu_custom_call.1} parent=1 // pred_fallthru
      _
    %289 = vsyncpa [#allocation3], 1
    %290 = vsyncpa [#allocation6], 1
    %291 = vsyncpa [#allocation4], 1

</llo_original>
